<compile_context>
chip_gen: v5e
topology: v5e:2x2
jax: 0.10.0
libtpu: 0.0.40
codegen_flags: <defaults>
</compile_context>

<pallas_src>
import functools
import math

import jax
import jax.numpy as jnp
from jax import lax
from jax.experimental import pallas as pl
from jax.experimental.pallas import tpu as pltpu


def _cdiv(a, b):
    return -(-a // b)


def _round_up(a, b):
    return _cdiv(a, b) * b


def _label_smoothing_kernel(x_ref, t_ref, part_ref, *,
                            confidence, smoothing_value, entropy_const,
                            pad_index, n_rows, num_parts):
    part = pl.program_id(0)
    step = pl.program_id(1)

    @pl.when(step == 0)
    def _():
        part_ref[...] = jnp.zeros_like(part_ref)

    x = x_ref[...]                              # (R, V) logits, native dtype
    t = t_ref[...]                              # (R, 1) int32 targets
    R, V = x.shape

    # Row-validity mask: handles the ragged last tile and any fully-masked
    # over-allocated tile of an uneven part split (no host-side padding copy).
    tile_idx = step * num_parts + part          # interleaved tile assignment
    row = tile_idx * R + lax.broadcasted_iota(jnp.int32, (R, 1), 0)
    contributes = jnp.logical_and(row < n_rows, t != pad_index)        # (R, 1)

    # Row max in the native dtype (exact and order-preserving for bf16);
    # upcast only inside the expression feeding the fused reductions.
    m = jnp.max(x, axis=-1, keepdims=True)                             # (R, 1)
    z = x.astype(jnp.float32) - m.astype(jnp.float32)                  # (R, V) f32

    # Pass 1 over z: log-sum-exp denominator.
    lse = jnp.log(jnp.sum(jnp.exp(z), axis=-1, keepdims=True))         # (R, 1)

    # Pass 2 over z: single q-weighted reduction (weights sum to 1, so the
    # old z_sum reduction and the V*lse term vanish).
    col = lax.broadcasted_iota(jnp.int32, (R, V), 1)
    w = jnp.where(col == t, jnp.float32(confidence), jnp.float32(smoothing_value))
    s = jnp.sum(w * z, axis=-1, keepdims=True)                         # (R, 1)
    z_pad = z[:, pad_index:pad_index + 1]                              # static column slice

    # For a non-pad row:
    #   sum_v q_v (log q_v - logp_v)
    #     = entropy_const - (s - smoothing_value * z_pad) + lse
    loss_rows = entropy_const - s + smoothing_value * z_pad + lse

    # jnp.where (select), not multiply, so NaN/Inf from garbage rows of a
    # partial tile never propagates into the accumulator.
    part_ref[...] += jnp.where(contributes, loss_rows, jnp.float32(0.0))


def _tpu_device_kind():
    try:
        return jax.devices()[0].device_kind.lower()
    except Exception:
        return ""


def label_smoothing_loss(outputs, targets, *, label_smoothing, vocabulary_size,
                         pad_index=0, tile_rows=None, num_parts=2):
    """outputs: (B, S, V) float (any float dtype); targets: (B, S) int.

    Returns (loss, count) matching LabelSmoothingLoss.forward.
    """
    assert 0.0 < label_smoothing <= 1.0
    B, S, V = outputs.shape
    assert V == vocabulary_size
    assert V > 2, "smoothing_value = label_smoothing / (V - 2) requires V > 2"
    assert 0 <= pad_index < V

    confidence = 1.0 - label_smoothing
    smoothing_value = label_smoothing / (V - 2)
    # sum_v q_v * log(q_v): (V-2) smoothed columns + the confidence column.
    entropy_const = label_smoothing * math.log(smoothing_value)
    if confidence > 0.0:
        entropy_const += confidence * math.log(confidence)

    N = B * S
    x = outputs.reshape(N, V)                       # native dtype: no extra HBM pass
    t = targets.reshape(N, 1).astype(jnp.int32)

    itemsize = jnp.dtype(x.dtype).itemsize

    # Per-generation block / VMEM sizing.
    kind = _tpu_device_kind()
    is_v7 = ("v7" in kind) or ("tpu7" in kind)
    is_v5_or_v6 = any(g in kind for g in ("v5", "v6", "tpu5", "tpu6"))
    if is_v7 or not is_v5_or_v6:
        # v7x: only 64 MiB VMEM per TensorCore -> keep 4 MiB f32 blocks and a
        # 48 MiB ceiling (also the conservative default on unknown hardware).
        budget_f32_bytes = 4 * 1024 * 1024
        vmem_cap = 48 * 1024 * 1024
    else:
        # v5e / v6e: 128 MiB physical VMEM -> larger row tiles amortize the
        # ~0.35 us/step pipeline overhead.
        budget_f32_bytes = 8 * 1024 * 1024
        vmem_cap = 96 * 1024 * 1024

    if tile_rows is None:
        r = budget_f32_bytes // (V * 4)
        r = max(8, min(2048, (r // 8) * 8))
        r = min(r, max(8, _round_up(_cdiv(N, num_parts), 8)))
        tile_rows = int(r)
    assert tile_rows > 0 and tile_rows % 8 == 0

    nt = _cdiv(N, tile_rows)               # total row tiles
    tpp = _cdiv(nt, num_parts)             # row tiles per partial accumulator

    def in_map(c, i):
        # Interleaved tile assignment (balanced across parts); clamp so an
        # over-allocated tile never issues an out-of-range DMA -- such tiles
        # are fully masked inside the kernel.
        return (jnp.minimum(i * num_parts + c, nt - 1), 0)

    kernel = functools.partial(
        _label_smoothing_kernel,
        confidence=confidence,
        smoothing_value=smoothing_value,
        entropy_const=entropy_const,
        pad_index=pad_index,
        n_rows=N,
        num_parts=num_parts,
    )

    # double-buffered native-dtype input blocks + ~4 live f32 (R, V) temporaries
    # (z, exp / weight fusion scratch) + slack.
    vmem_limit = 2 * tile_rows * V * itemsize + 4 * tile_rows * V * 4 + (2 << 20)
    vmem_limit = int(min(vmem_cap, max(32 * 1024 * 1024, vmem_limit)))

    loss_parts = pl.pallas_call(
        kernel,
        out_shape=jax.ShapeDtypeStruct((num_parts * tile_rows, 1), jnp.float32),
        grid_spec=pltpu.PrefetchScalarGridSpec(
            num_scalar_prefetch=0,
            grid=(num_parts, tpp),
            in_specs=[
                pl.BlockSpec((tile_rows, V), in_map),
                pl.BlockSpec((tile_rows, 1), in_map),
            ],
            out_specs=pl.BlockSpec((tile_rows, 1), lambda c, i: (c, 0)),
        ),
        compiler_params=pltpu.CompilerParams(
            dimension_semantics=("parallel", "arbitrary"),
            vmem_limit_bytes=vmem_limit),
    )(x, t)

    loss = jnp.sum(loss_parts)
    count = jnp.sum(targets != pad_index).astype(jnp.int32)
    return loss, count


def _reference(outputs, targets, *, label_smoothing, vocabulary_size, pad_index=0):
    """Pure-JAX reference of the PyTorch forward (for verification)."""
    confidence = 1.0 - label_smoothing
    smoothing_value = label_smoothing / (vocabulary_size - 2)
    B, S, V = outputs.shape
    logp = jax.nn.log_softmax(outputs.astype(jnp.float32), axis=-1).reshape(-1, V)
    t = targets.reshape(-1)
    col = jnp.arange(V)[None, :]
    q = jnp.full((t.shape[0], V), smoothing_value, dtype=jnp.float32)
    q = jnp.where(col == pad_index, 0.0, q)
    q = jnp.where(col == t[:, None], confidence, q)
    q = jnp.where((t == pad_index)[:, None], 0.0, q)
    kl = jnp.where(q > 0.0, q * (jnp.log(jnp.where(q > 0.0, q, 1.0)) - logp), 0.0)
    return jnp.sum(kl), jnp.sum(targets != pad_index)


if __name__ == "__main__":
    label_smoothing = 0.1
    pad_index = 0
    key = jax.random.PRNGKey(0)
    k1, k2, k3, k4 = jax.random.split(key, 4)

    # Test 1: f32 logits, shapes consistent with the module (batch, seq, vocab).
    B, S, V = 2, 8, 32
    outputs = jax.random.normal(k1, (B, S, V), dtype=jnp.float32)
    targets = jax.random.randint(k2, (B, S), minval=0, maxval=V, dtype=jnp.int32)

    loss, count = label_smoothing_loss(
        outputs, targets, label_smoothing=label_smoothing,
        vocabulary_size=V, pad_index=pad_index)
    jax.block_until_ready((loss, count))

    ref_loss, ref_count = _reference(
        outputs, targets, label_smoothing=label_smoothing,
        vocabulary_size=V, pad_index=pad_index)
    assert jnp.allclose(loss, ref_loss, rtol=1e-4, atol=1e-3), (loss, ref_loss)
    assert int(count) == int(ref_count), (count, ref_count)

    # Test 2: bf16 logits + a row count that is not a multiple of the tile
    # (exercises native-dtype streaming and the in-kernel ragged-tail mask).
    B2, S2, V2 = 3, 5, 40
    outputs2 = jax.random.normal(k3, (B2, S2, V2), dtype=jnp.bfloat16)
    targets2 = jax.random.randint(k4, (B2, S2), minval=0, maxval=V2, dtype=jnp.int32)

    loss2, count2 = label_smoothing_loss(
        outputs2, targets2, label_smoothing=label_smoothing,
        vocabulary_size=V2, pad_index=pad_index)
    jax.block_until_ready((loss2, count2))

    ref_loss2, ref_count2 = _reference(
        outputs2, targets2, label_smoothing=label_smoothing,
        vocabulary_size=V2, pad_index=pad_index)
    assert jnp.allclose(loss2, ref_loss2, rtol=1e-4, atol=1e-3), (loss2, ref_loss2)
    assert int(count2) == int(ref_count2), (count2, ref_count2)

    print("KERNEL_OK")
</pallas_src>

<mosaic_0001>
module attributes {stable_mosaic.version = 11 : i64} {
  func.func @_label_smoothing_kernel(%arg0: i32, %arg1: i32, %arg2: memref<8x32xf32, #tpu.memory_space<vmem>>, %arg3: memref<8x1xi32, #tpu.memory_space<vmem>>, %arg4: memref<8x1xf32, #tpu.memory_space<vmem>>) attributes {dimension_semantics = [#tpu.dimension_semantics<parallel>, #tpu.dimension_semantics<arbitrary>], iteration_bounds = array<i64: 2, 1>, scalar_prefetch = 0 : i64, scratch_operands = 0 : i64, tpu.core_type = #tpu.core_type<tc>, window_params = [{transform_indices = @transform_0, window_bounds = array<i64: 8, 32>}, {transform_indices = @transform_1, window_bounds = array<i64: 8, 1>}, {transform_indices = @transform_2, window_bounds = array<i64: 8, 1>}]} {
    %c0_i32 = arith.constant 0 : i32
    %0 = arith.cmpi eq, %arg1, %c0_i32 : i32
    %1 = arith.extui %0 : i1 to i32
    %c0_i32_0 = arith.constant 0 : i32
    %2 = arith.cmpi ne, %1, %c0_i32_0 : i32
    scf.if %2 {
      %cst_16 = arith.constant 0.000000e+00 : f32
      %45 = vector.broadcast %cst_16 : f32 to vector<8x1xf32>
      %c0_17 = arith.constant 0 : index
      %c0_18 = arith.constant 0 : index
      %46 = vector.load %arg4[%c0_17, %c0_18] : memref<8x1xf32, #tpu.memory_space<vmem>>, vector<8x1xf32>
      tpu.vector_store %arg4[%c0_17, %c0_18], %45 {strides = array<i32>} : memref<8x1xf32, #tpu.memory_space<vmem>>, vector<8x1xf32>,
    } else {
    }
    %c0 = arith.constant 0 : index
    %c0_1 = arith.constant 0 : index
    %3 = vector.load %arg2[%c0, %c0_1] : memref<8x32xf32, #tpu.memory_space<vmem>>, vector<8x32xf32>
    %c0_2 = arith.constant 0 : index
    %c0_3 = arith.constant 0 : index
    %4 = vector.load %arg3[%c0_2, %c0_3] : memref<8x1xi32, #tpu.memory_space<vmem>>, vector<8x1xi32>
    %c2_i32 = arith.constant 2 : i32
    %5 = arith.muli %arg1, %c2_i32 : i32
    %6 = arith.addi %5, %arg0 : i32
    %c8_i32 = arith.constant 8 : i32
    %7 = arith.muli %6, %c8_i32 : i32
    %8 = tpu.iota {dimensions = array<i32: 0>} : vector<8x1xi32>
    %9 = vector.broadcast %7 : i32 to vector<8x1xi32>
    %10 = arith.addi %9, %8 : vector<8x1xi32>
    %c16_i32 = arith.constant 16 : i32
    %11 = vector.broadcast %c16_i32 : i32 to vector<8x1xi32>
    %12 = arith.cmpi slt, %10, %11 : vector<8x1xi32>
    %c0_i32_4 = arith.constant 0 : i32
    %13 = vector.broadcast %c0_i32_4 : i32 to vector<8x1xi32>
    %14 = arith.cmpi ne, %4, %13 : vector<8x1xi32>
    %15 = arith.andi %12, %14 : vector<8x1xi1>
    %cst = arith.constant dense<0xFF800000> : vector<8xf32>
    %16 = vector.multi_reduction <maximumf>, %3, %cst [1] : vector<8x32xf32> to vector<8xf32>
    %17 = vector.shape_cast %16 : vector<8xf32> to vector<8x1xf32>
    %18 = vector.broadcast %17 : vector<8x1xf32> to vector<8x32xf32>
    %19 = arith.subf %3, %18 : vector<8x32xf32>
    %20 = math.exp %19 : vector<8x32xf32>
    %cst_5 = arith.constant dense<0.000000e+00> : vector<8xf32>
    %21 = vector.multi_reduction <add>, %20, %cst_5 [1] : vector<8x32xf32> to vector<8xf32>
    %22 = vector.shape_cast %21 : vector<8xf32> to vector<8x1xf32>
    %23 = math.log %22 : vector<8x1xf32>
    %24 = tpu.iota {dimensions = array<i32: 1>} : vector<8x32xi32>
    %25 = vector.broadcast %4 : vector<8x1xi32> to vector<8x32xi32>
    %26 = arith.cmpi eq, %24, %25 : vector<8x32xi32>
    %cst_6 = arith.constant 0.899999976 : f32
    %cst_7 = arith.constant 0.00333333341 : f32
    %27 = vector.broadcast %cst_6 : f32 to vector<8x32xf32>
    %28 = vector.broadcast %cst_7 : f32 to vector<8x32xf32>
    %29 = arith.select %26, %27, %28 : vector<8x32xi1>, vector<8x32xf32>
    %30 = arith.mulf %29, %19 : vector<8x32xf32>
    %cst_8 = arith.constant dense<0.000000e+00> : vector<8xf32>
    %31 = vector.multi_reduction <add>, %30, %cst_8 [1] : vector<8x32xf32> to vector<8xf32>
    %32 = vector.shape_cast %31 : vector<8xf32> to vector<8x1xf32>
    %33 = vector.extract_strided_slice %19 {offsets = [0, 0], sizes = [8, 1], strides = [1, 1]} : vector<8x32xf32> to vector<8x1xf32>
    %cst_9 = arith.constant -0.665202737 : f32
    %34 = vector.broadcast %cst_9 : f32 to vector<8x1xf32>
    %35 = arith.subf %34, %32 : vector<8x1xf32>
    %cst_10 = arith.constant 0.00333333341 : f32
    %36 = vector.broadcast %cst_10 : f32 to vector<8x1xf32>
    %37 = arith.mulf %36, %33 : vector<8x1xf32>
    %38 = arith.addf %35, %37 : vector<8x1xf32>
    %39 = arith.addf %38, %23 : vector<8x1xf32>
    %c0_11 = arith.constant 0 : index
    %c0_12 = arith.constant 0 : index
    %40 = vector.load %arg4[%c0_11, %c0_12] : memref<8x1xf32, #tpu.memory_space<vmem>>, vector<8x1xf32>
    %cst_13 = arith.constant 0.000000e+00 : f32
    %41 = vector.broadcast %cst_13 : f32 to vector<8x1xf32>
    %42 = arith.select %15, %39, %41 : vector<8x1xi1>, vector<8x1xf32>
    %43 = arith.addf %40, %42 : vector<8x1xf32>
    %c0_14 = arith.constant 0 : index
    %c0_15 = arith.constant 0 : index
    %44 = vector.load %arg4[%c0_14, %c0_15] : memref<8x1xf32, #tpu.memory_space<vmem>>, vector<8x1xf32>
    tpu.vector_store %arg4[%c0_14, %c0_15], %43 {strides = array<i32>} : memref<8x1xf32, #tpu.memory_space<vmem>>, vector<8x1xf32>,
    return
  }
  func.func @transform_0(%arg0: i32, %arg1: i32) -> (i32, i32) {
    %c2_i32 = arith.constant 2 : i32
    %0 = arith.muli %arg1, %c2_i32 : i32
    %1 = arith.addi %0, %arg0 : i32
    %c1_i32 = arith.constant 1 : i32
    %2 = arith.minsi %1, %c1_i32 : i32
    %c0_i32 = arith.constant 0 : i32
    %c0_i32_0 = arith.constant 0 : i32
    return %2, %c0_i32 : i32, i32
  }
  func.func @transform_1(%arg0: i32, %arg1: i32) -> (i32, i32) {
    %c2_i32 = arith.constant 2 : i32
    %0 = arith.muli %arg1, %c2_i32 : i32
    %1 = arith.addi %0, %arg0 : i32
    %c1_i32 = arith.constant 1 : i32
    %2 = arith.minsi %1, %c1_i32 : i32
    %c0_i32 = arith.constant 0 : i32
    %c0_i32_0 = arith.constant 0 : i32
    return %2, %c0_i32 : i32, i32
  }
  func.func @transform_2(%arg0: i32, %arg1: i32) -> (i32, i32) {
    %c0_i32 = arith.constant 0 : i32
    %c0_i32_0 = arith.constant 0 : i32
    return %arg0, %c0_i32 : i32, i32
  }
}

</mosaic_0001>

<llo_original>
// kernel: tpu_custom_call.1
$region0: #{tpu_custom_call.1}
  #allocation0 [shape = 'u32[]', space=smem, size = 0x4, offset = 0x4, fixed_abs, tag = 'smem constant byte address 0x4 - core index']
  #allocation1 [shape = 'u32[72,128]{1,0:T(1,128)}', space=vmem, size = 0x9000, scoped, tag = 'internal scratch']
  %s0 = inlined_call_operand.vmem [shape: f32[16,32], index: 0, kind: input, shape index: {}]
  %s1 = inlined_call_operand.vmem [shape: s32[16,1], index: 1, kind: input, shape index: {}]
  %s2 = inlined_call_operand.vmem [shape: f32[16,1], index: 2, kind: output, shape index: {}]
  %s3 = sld [smem:[#allocation0]]
  $region45: #{tpu_custom_call.1} parent=0
    _
  %s5 = ssub.s32 1, %s3
  %s6 = scalar_select 0, %s5, %s3
  loop: start=0, step=1, limit=4
  $region2: #{tpu_custom_call.1} parent=0 // loop_pre_header
    _
  $region3: #{tpu_custom_call.1} parent=0 // loop_header
    %s8 = sphi 0, %s12
    %p9 = scmp.ge.s32.totalorder %s8, 4
    %s15 = sphi 0, %s27
    %s16 = sphi 0, %s23
    %s17 = sphi 0, %s15
    %s18 = sphi 0, %s16
    %s19 = sphi 0, %s17
    %s20 = sphi 0, %s18
    %s38 = sphi 0, %s40
    %s41 = sphi 0, %s38
    %s42 = sphi 0, %s41
    %s58 = sphi 0, %s42
    %s72 = sphi 0, %s74
    %s75 = sphi 0, %s72
    %s76 = sphi 0, %s75
    %s92 = sphi 0, %s76
    %s98 = sphi 0, %s100
    %s101 = sphi 0, %s98
    %s102 = sphi 0, %s101
    %s118 = sphi 0, %s102
  $region4: #{tpu_custom_call.1} parent=0 // loop_header_branch
    %11 = sbr.rel (%p9) target = $region8
  $region5: #{tpu_custom_call.1} parent=0 // loop_body
    %s13 = ssub.s32 %s8, 1
    %s14 = ssub.s32 %s8, 2
    %s21 = sadd.s32 1, %s16
    %p22 = scmp.ge.s32.totalorder %s21, 1
    %s23 = scalar_select %p22, 0, %s21
    %s24 = sadd.s32 1, %s15
    %s25 = scalar_select %p22, %s24, %s15
    %p26 = scmp.ge.s32.totalorder %s25, 2
    %s27 = scalar_select %p26, 0, %s25
    %s28 = smul.u32 %s16, 2
    %s29 = sadd.s32 %s28, %s15
    %p30 = scmp.lt.s32.totalorder %s29, 1
    %s31 = scalar_select %p30, %s29, 1
    %s32 = smul.u32 %s23, 2
    %s33 = sadd.s32 %s32, %s27
    %p34 = scmp.lt.s32.totalorder %s33, 1
    %s35 = scalar_select %p34, %s33, 1
    %s36 = ssub.s32 %s31, %s35
    %p37 = scmp.eq.s32.totalorder %s36, 0
    %s39 = sadd.s32 %s38, 1
    %s40 = scalar_select %p37, %s38, %s39
    %p43 = pneg %p37
    %p44 = scmp.eq.s32.totalorder %s8, 1
    %p45 = por %p43, %p44
    %p46 = scmp.ne.s32.totalorder %s38, %s41
    %p47 = scmp.eq.s32.totalorder %s8, 0
    %p48 = por %p46, %p47
    %p49 = scmp.ne.s32.totalorder %s38, %s41
    %p50 = scmp.eq.s32.totalorder %s13, 1
    %p51 = por %p49, %p50
    %p52 = scmp.ne.s32.totalorder %s41, %s42
    %p53 = scmp.eq.s32.totalorder %s13, 0
    %p54 = por %p52, %p53
    %p55 = scmp.ne.s32.totalorder %s41, %s42
    %p56 = scmp.eq.s32.totalorder %s14, 1
    %p57 = por %p55, %p56
    %p59 = scmp.ne.s32.totalorder %s42, %s58
    %p60 = scmp.eq.s32.totalorder %s14, 0
    %p61 = por %p59, %p60
    %s62 = smul.u32 %s16, 2
    %s63 = sadd.s32 %s62, %s15
    %p64 = scmp.lt.s32.totalorder %s63, 1
    %s65 = scalar_select %p64, %s63, 1
    %s66 = smul.u32 %s23, 2
    %s67 = sadd.s32 %s66, %s27
    %p68 = scmp.lt.s32.totalorder %s67, 1
    %s69 = scalar_select %p68, %s67, 1
    %s70 = ssub.s32 %s65, %s69
    %p71 = scmp.eq.s32.totalorder %s70, 0
    %s73 = sadd.s32 %s72, 1
    %s74 = scalar_select %p71, %s72, %s73
    %p77 = pneg %p71
    %p78 = scmp.eq.s32.totalorder %s8, 1
    %p79 = por %p77, %p78
    %p80 = scmp.ne.s32.totalorder %s72, %s75
    %p81 = scmp.eq.s32.totalorder %s8, 0
    %p82 = por %p80, %p81
    %p83 = scmp.ne.s32.totalorder %s72, %s75
    %p84 = scmp.eq.s32.totalorder %s13, 1
    %p85 = por %p83, %p84
    %p86 = scmp.ne.s32.totalorder %s75, %s76
    %p87 = scmp.eq.s32.totalorder %s13, 0
    %p88 = por %p86, %p87
    %p89 = scmp.ne.s32.totalorder %s75, %s76
    %p90 = scmp.eq.s32.totalorder %s14, 1
    %p91 = por %p89, %p90
    %p93 = scmp.ne.s32.totalorder %s76, %s92
    %p94 = scmp.eq.s32.totalorder %s14, 0
    %p95 = por %p93, %p94
    %s96 = ssub.s32 %s15, %s27
    %p97 = scmp.eq.s32.totalorder %s96, 0
    %s99 = sadd.s32 %s98, 1
    %s100 = scalar_select %p97, %s98, %s99
    %p103 = pneg %p97
    %p104 = scmp.eq.s32.totalorder %s8, 1
    %p105 = por %p103, %p104
    %p106 = scmp.ne.s32.totalorder %s98, %s101
    %p107 = scmp.eq.s32.totalorder %s8, 0
    %p108 = por %p106, %p107
    %p109 = scmp.ne.s32.totalorder %s98, %s101
    %p110 = scmp.eq.s32.totalorder %s13, 1
    %p111 = por %p109, %p110
    %p112 = scmp.ne.s32.totalorder %s101, %s102
    %p113 = scmp.eq.s32.totalorder %s13, 0
    %p114 = por %p112, %p113
    %p115 = scmp.ne.s32.totalorder %s101, %s102
    %p116 = scmp.eq.s32.totalorder %s14, 1
    %p117 = por %p115, %p116
    %p119 = scmp.ne.s32.totalorder %s102, %s118
    %p120 = scmp.eq.s32.totalorder %s14, 0
    %p121 = por %p119, %p120
    %p122 = scmp.le.s32.totalorder 1, %s8
    %p123 = scmp.lt.s32.totalorder %s8, 3
    %p124 = pnand %p122, %p123
    %p125 = pneg %p124
    // Predicated region
    $region9: #{tpu_custom_call.1} parent=5 // pred_check
      _
    $region10: #{tpu_custom_call.1} parent=5 // pred_check_branch
      %127 = sbr.rel (%p124) target = $region12
    $region11: #{tpu_custom_call.1} parent=5 // pred_region
      %s128 = ssub.s32 %s8, 1
    $region12: #{tpu_custom_call.1} parent=5 // pred_fallthru
      _
    %p129 = scmp.lt.s32.totalorder %s8, 2
    // Predicated region
    $region13: #{tpu_custom_call.1} parent=5 // pred_check
      %p130 = pneg %p129
    $region14: #{tpu_custom_call.1} parent=5 // pred_check_branch
      %132 = sbr.rel (%p130) target = $region16
    $region15: #{tpu_custom_call.1} parent=5 // pred_region
      // Predicated region
      $region17: #{tpu_custom_call.1} parent=15 // pred_check
        %p133 = pneg %p48
      $region18: #{tpu_custom_call.1} parent=15 // pred_check_branch
        %135 = sbr.rel (%p133) target = $region20
      $region19: #{tpu_custom_call.1} parent=15 // pred_region
        %s136 = smul.u32 %s16, 2
        %s137 = sadd.s32 %s136, %s15
        %p138 = scmp.lt.s32.totalorder %s137, 1
        %s139 = scalar_select %p138, %s137, 1
        %p140 = scmp.lt.s32.totalorder %s139, 1
        %s141 = scalar_select %p140, %s139, 1
        %s142 = smul.addr %s141, 8
        %s143 = scalar_lea.vmem %s0, %s142
        %s144 = smul.u32 %s16, 2
        %s145 = sadd.s32 %s144, %s15
        %p146 = scmp.lt.s32.totalorder %s145, 1
        %s147 = scalar_select %p146, %s145, 1
      $region20: #{tpu_custom_call.1} parent=15 // pred_fallthru
        _
      // Predicated region
      $region21: #{tpu_custom_call.1} parent=15 // pred_check
        %p148 = pneg %p82
      $region22: #{tpu_custom_call.1} parent=15 // pred_check_branch
        %150 = sbr.rel (%p148) target = $region24
      $region23: #{tpu_custom_call.1} parent=15 // pred_region
        %s151 = smul.u32 %s16, 2
        %s152 = sadd.s32 %s151, %s15
        %p153 = scmp.lt.s32.totalorder %s152, 1
        %s154 = scalar_select %p153, %s152, 1
        %p155 = scmp.lt.s32.totalorder %s154, 1
        %s156 = scalar_select %p155, %s154, 1
        %s157 = smul.addr %s156, 8
        %s158 = scalar_lea.vmem %s1, %s157
        %s159 = smul.u32 %s16, 2
        %s160 = sadd.s32 %s159, %s15
        %p161 = scmp.lt.s32.totalorder %s160, 1
        %s162 = scalar_select %p161, %s160, 1
      $region24: #{tpu_custom_call.1} parent=15 // pred_fallthru
        _
    $region16: #{tpu_custom_call.1} parent=5 // pred_fallthru
      _
    %p163 = scmp.le.s32.totalorder 1, %s8
    %p164 = scmp.lt.s32.totalorder %s8, 3
    %p165 = pnand %p163, %p164
    %p166 = pneg %p165
    // Predicated region
    $region25: #{tpu_custom_call.1} parent=5 // pred_check
      _
    $region26: #{tpu_custom_call.1} parent=5 // pred_check_branch
      %168 = sbr.rel (%p165) target = $region28
    $region27: #{tpu_custom_call.1} parent=5 // pred_region
      %s169 = ssub.s32 %s8, 1
      %s170 = smul.u32 %s18, 2
      %s171 = sadd.s32 %s170, %s17
      %p172 = scmp.lt.s32.totalorder %s171, 1
      %s173 = scalar_select %p172, %s171, 1
      %p174 = scmp.lt.s32.totalorder %s173, 1
      %s175 = scalar_select %p174, %s173, 1
      %s176 = smul.addr %s175, 8
      %s177 = scalar_lea.vmem %s0, %s176
      %p178 = pneg %p54
      %p179 = pneg %p51
      %s180 = smul.u32 %s18, 2
      %s181 = sadd.s32 %s180, %s17
      %p182 = scmp.lt.s32.totalorder %s181, 1
      %s183 = scalar_select %p182, %s181, 1
      %p184 = scmp.lt.s32.totalorder %s183, 1
      %s185 = scalar_select %p184, %s183, 1
      %s186 = smul.addr %s185, 8
      %s187 = scalar_lea.vmem %s1, %s186
      %p188 = pneg %p88
      %p189 = pneg %p85
      %p190 = pneg %p114
      %p191 = pneg %p111
      %p192 = scmp.lt.s32.totalorder %s17, 1
      %s193 = scalar_select %p192, %s17, 1
      %s194 = smul.addr %s193, 8
      %s195 = scalar_lea.vmem %s2, %s194
      %s196 = smul.u32 %s18, 2
      %s197 = sadd.s32 %s196, %s17
      %p198 = scmp.lt.s32.totalorder %s197, 1
      %s199 = scalar_select %p198, %s197, 1
      %p200 = scmp.lt.s32.totalorder %s199, 1
      %s201 = scalar_select %p200, %s199, 1
      %s202 = smul.addr %s201, 8
      %s203 = scalar_lea.vmem %s0, %s202
      %s204 = smul.u32 %s18, 2
      %s205 = sadd.s32 %s204, %s17
      %p206 = scmp.lt.s32.totalorder %s205, 1
      %s207 = scalar_select %p206, %s205, 1
      %s208 = smul.u32 %s18, 2
      %s209 = sadd.s32 %s208, %s17
      %p210 = scmp.lt.s32.totalorder %s209, 1
      %s211 = scalar_select %p210, %s209, 1
      %p212 = scmp.lt.s32.totalorder %s211, 1
      %s213 = scalar_select %p212, %s211, 1
      %s214 = smul.addr %s213, 8
      %s215 = scalar_lea.vmem %s1, %s214
      %s216 = smul.u32 %s18, 2
      %s217 = sadd.s32 %s216, %s17
      %p218 = scmp.lt.s32.totalorder %s217, 1
      %s219 = scalar_select %p218, %s217, 1
      %p220 = scmp.lt.s32.totalorder %s17, 1
      %s221 = scalar_select %p220, %s17, 1
      %s222 = smul.addr %s221, 8
      %s223 = scalar_lea.vmem %s2, %s222
      %p224 = scmp.eq.s32.totalorder %s18, 0
      // Predicated region
      $region29: #{tpu_custom_call.1} parent=27 // pred_check
        %p225 = pneg %p224
      $region30: #{tpu_custom_call.1} parent=27 // pred_check_branch
        %227 = sbr.rel (%p225) target = $region32
      $region31: #{tpu_custom_call.1} parent=27 // pred_region
        %vm228 = vcmask 7168
        %229 = vst.msk [vmem:[%s223] sm:$0xff] %vm228, 0.0
      $region32: #{tpu_custom_call.1} parent=27 // pred_fallthru
        _
      %v230 = vld [vmem:[%s203] sm:$0xff]
      %v231 = vld [vmem:[%s215] sm:$0xff]
      %s232 = smul.u32 %s18, 2
      %s233 = sadd.s32 %s232, %s17
      %s234 = smul.u32 %s233, 8
      %v235 = vlaneseq
      %v236 = vshrl.u32 %v235, 7
      %v237 = vstv %s234
      %v238 = vadd.s32 %v237, %v236
      %vm239 = vcmp.lt.s32.totalorder %v238, 16
      %vm240 = vcmp.ne.s32.totalorder %v231, 0
      %vm241 = vmand %vm239, %vm240
      %vm242 = vcmask 261120
      %v243 = vsel %vm242, %v230, -inf
      %244 = vmax.xlane.f32.xlu0 %v243
      %v245 = vpop.xlane.xlu0 %244
      %v246 = vsub.f32 %v230, %v245
      %v247 = vmul.f32 %v246, 1.442695
      %v248 = vpow.pop %v247
      %v249 = vsel %vm242, %v248, 0.0
      %250 = vadd.xlane.f32.xlu0 %v249
      %v251 = vpop.xlane.xlu0 %250
      %v252 = vlog2.pop %v251
      %v253 = vmul.f32 %v252, 0.6931472
      %v254 = vlaneseq
      %v255 = vand.u32 %v254, 127
      %256 = vset.pattern.permute.xlu0 0
      %257 = vperm.xlu0 %256, %v231
      %v258 = vpop.permute.xlu0 %257
      %vm259 = vcmp.eq.s32.totalorder %v255, %v258
      %v260 = vsel %vm259, 0.9, 0.0033333334
      %v261 = vmul.f32 %v260, %v246
      %v262 = vsel %vm242, %v261, 0.0
      %263 = vadd.xlane.f32.xlu0 %v262
      %v264 = vpop.xlane.xlu0 %263
      %v265 = vsub.f32 -0.66520274, %v264
      %v266 = vmul.f32 %v246, 0.0033333334
      %v267 = vadd.f32 %v265, %v266
      %v268 = vadd.f32 %v267, %v253
      %v269 = vld [vmem:[%s223] sm:$0xff]
      %v270 = vsel %vm241, %v268, 0.0
      %v271 = vadd.f32 %v269, %v270
      %vm272 = vcmask 7168
      %273 = vst.msk [vmem:[%s223] sm:$0xff] %vm272, %v271
      %p274 = scmp.lt.s32.totalorder %s17, 1
      %s275 = scalar_select %p274, %s17, 1
      %s276 = smul.addr %s275, 8
      %s277 = scalar_lea.vmem %s2, %s276
      // Predicated region
      $region33: #{tpu_custom_call.1} parent=27 // pred_check
        %p278 = pneg %p111
      $region34: #{tpu_custom_call.1} parent=27 // pred_check_branch
        %280 = sbr.rel (%p278) target = $region36
      $region35: #{tpu_custom_call.1} parent=27 // pred_region
        _
      $region36: #{tpu_custom_call.1} parent=27 // pred_fallthru
        _
    $region28: #{tpu_custom_call.1} parent=5 // pred_fallthru
      _
    %p281 = scmp.le.s32.totalorder 2, %s8
    // Predicated region
    $region37: #{tpu_custom_call.1} parent=5 // pred_check
      %p282 = pneg %p281
    $region38: #{tpu_custom_call.1} parent=5 // pred_check_branch
      %284 = sbr.rel (%p282) target = $region40
    $region39: #{tpu_custom_call.1} parent=5 // pred_region
      %s285 = ssub.s32 %s8, 2
      // Predicated region
      $region41: #{tpu_custom_call.1} parent=39 // pred_check
        %p286 = pneg %p117
      $region42: #{tpu_custom_call.1} parent=39 // pred_check_branch
        %288 = sbr.rel (%p286) target = $region44
      $region43: #{tpu_custom_call.1} parent=39 // pred_region
        %p289 = scmp.lt.s32.totalorder %s19, 1
        %s290 = scalar_select %p289, %s19, 1
        %s291 = smul.addr %s290, 8
        %s292 = scalar_lea.vmem %s2, %s291
      $region44: #{tpu_custom_call.1} parent=39 // pred_fallthru
        _
    $region40: #{tpu_custom_call.1} parent=5 // pred_fallthru
      _
  $region6: #{tpu_custom_call.1} parent=0 // loop_footer
    %s12 = sadd.s32 1, %s8
  $region7: #{tpu_custom_call.1} parent=0 // loop_footer_branch
    %7 = sbr.rel target = $region3
  $region8: #{tpu_custom_call.1} parent=0 // loop_exit
    _

</llo_original>
